<compile_context>
chip_gen: v7x
topology: tpu7x:2x2x1
jax: 0.10.0
libtpu: 0.0.40
codegen_flags: <defaults>
</compile_context>

<pallas_src>
import math

import jax
import jax.numpy as jnp
from jax.experimental import pallas as pl
from jax.experimental.pallas import tpu as pltpu


# ----------------------------------------------------------------------------
# Kernels
# ----------------------------------------------------------------------------
def support_kernel(x_ref, wbd_ref, s_ref):
    # x_ref  : (TM_S, K*Fin)   row tile of all-particle features
    # wbd_ref: (K*Fin, L)      block-diagonal weight (zero-padded to lane width L)
    # s_ref  : (TM_S, L)       lane-dense support row tile
    s_ref[...] = jnp.dot(
        x_ref[...], wbd_ref[...], preferred_element_type=jnp.float32
    ).astype(s_ref.dtype)


def adj_matmul_relu_kernel(adj_ref, s_ref, o_ref):
    # adj_ref: (TM, N)   streamed row tile of the dense adjacency
    # s_ref  : (N, L)    resident support slab (single-buffered)
    # o_ref  : (TM, L)   lane-dense output row tile
    out = jnp.dot(adj_ref[...], s_ref[...], preferred_element_type=jnp.float32)
    o_ref[...] = jnp.maximum(out, 0.0).astype(o_ref.dtype)  # ReLU


# ----------------------------------------------------------------------------
# Tiling heuristics
# ----------------------------------------------------------------------------
def _vmem_budget_bytes():
    """~75% of physical VMEM; conservative 64 MiB (v7x) fallback."""
    cap = 64 * 1024 * 1024
    try:
        info = pltpu.get_tpu_info()
        cap = int(getattr(info, "vmem_capacity_bytes", cap)) or cap
    except Exception:
        pass
    return (3 * cap) // 4


def _pick_row_tile(N, L, vmem_budget_bytes):
    """Row-tile for the adjacency matmul: MXU-aligned, VMEM-budgeted."""
    if N <= 256:
        return N  # full-dim block
    resident = 4 * N * L                      # support slab (Buffered(1))
    per_row = 4 * (2 * N + 2 * L)             # double-buffered adj tile + out tile
    avail = max(vmem_budget_bytes - resident, per_row * 128)
    tm = min(avail // per_row, 512, N)
    if tm >= 256:
        tm = (tm // 256) * 256                # MXU row alignment (v6e/v7x)
    elif tm >= 128:
        tm = 128                              # v5e MXU tile
    else:
        tm = max(8, (tm // 8) * 8)            # last-resort sublane alignment
    return int(tm)


# ----------------------------------------------------------------------------
# Wrapper
# ----------------------------------------------------------------------------
def graph_convolution_k(inp, adj, weight):
    """inp: (N, K, F_in), adj: (N, N) dense, weight: (F_in, F_out) -> (N, K, F_out)."""
    N, K, Fin = inp.shape
    Fout = weight.shape[1]

    # Lane-dense support/output width (multiple of 128 -> unmasked stores).
    L = max(128, ((K * Fout + 127) // 128) * 128)

    # Free row-major reshape (no transpose, no HBM round-trip).
    x2d = jnp.reshape(inp, (N, K * Fin))

    # Block-diagonal weight: (K*Fin, K*Fout), zero-padded to (K*Fin, L).
    w_bd = jnp.kron(jnp.eye(K, dtype=weight.dtype), weight)
    if L != K * Fout:
        w_bd = jnp.pad(w_bd, ((0, 0), (0, L - K * Fout)))

    vmem_budget = _vmem_budget_bytes()

    # --- Kernel 1: support = X @ W_blockdiag (tiny fraction of total FLOPs) ---
    tm_s = N if N <= 512 else 256
    support = pl.pallas_call(
        support_kernel,
        out_shape=jax.ShapeDtypeStruct((N, L), jnp.float32),
        grid_spec=pltpu.PrefetchScalarGridSpec(
            num_scalar_prefetch=0,
            grid=(pl.cdiv(N, tm_s),),
            in_specs=[
                pl.BlockSpec((tm_s, K * Fin), lambda i: (i, 0)),
                pl.BlockSpec((K * Fin, L), lambda i: (0, 0),
                             pipeline_mode=pl.Buffered(1)),  # constant block
            ],
            out_specs=pl.BlockSpec((tm_s, L), lambda i: (i, 0)),
        ),
        compiler_params=pltpu.CompilerParams(dimension_semantics=("parallel",)),
    )(x2d, w_bd)

    # --- Kernel 2: out = relu(adj @ support), row-tiled over N ----------------
    tm = _pick_row_tile(N, L, vmem_budget)
    grid = (pl.cdiv(N, tm),)

    cost = pl.CostEstimate(
        flops=2 * N * N * L,
        transcendentals=0,
        bytes_accessed=4 * (N * N + 2 * N * L),
    )

    out2d = pl.pallas_call(
        adj_matmul_relu_kernel,
        out_shape=jax.ShapeDtypeStruct((N, L), inp.dtype),
        grid_spec=pltpu.PrefetchScalarGridSpec(
            num_scalar_prefetch=0,
            grid=grid,
            in_specs=[
                pl.BlockSpec((tm, N), lambda i: (i, 0)),      # adj row tile (streamed)
                pl.BlockSpec((N, L), lambda i: (0, 0),
                             pipeline_mode=pl.Buffered(1)),   # support (resident, 1 buf)
            ],
            out_specs=pl.BlockSpec((tm, L), lambda i: (i, 0)),
        ),
        compiler_params=pltpu.CompilerParams(
            dimension_semantics=("parallel",),   # safe now: no carried scratch
            vmem_limit_bytes=int(vmem_budget),
        ),
        cost_estimate=cost,
    )(adj, support)

    if L != K * Fout:
        out2d = out2d[:, : K * Fout]
    return jnp.reshape(out2d, (N, K, Fout))


def init_weight(key, in_features, out_features, dtype=jnp.float32):
    # Matches torch.nn.init.uniform_(W, a=-init, b=init), init = sqrt(6/(in+out))
    init = math.sqrt(6.0 / (in_features + out_features))
    return jax.random.uniform(
        key, (in_features, out_features), dtype=dtype, minval=-init, maxval=init
    )


# ----------------------------------------------------------------------------
# Demo / self-test
# ----------------------------------------------------------------------------
if __name__ == "__main__":
    def reference(x, adj, w):
        sup = jnp.einsum("nki,io->nko", x, w)
        return jax.nn.relu(jnp.einsum("nm,mko->nko", adj, sup))

    key = jax.random.PRNGKey(0)

    # Config 1: small, single row tile, K*Fout = 128 already lane-dense.
    N, K, F_IN, F_OUT = 32, 4, 16, 32
    k_x, k_adj, k_w = jax.random.split(key, 3)
    x = jax.random.normal(k_x, (N, K, F_IN), dtype=jnp.float32)
    a = jax.random.uniform(k_adj, (N, N), dtype=jnp.float32)
    adj = (a + a.T) * 0.5 / N            # symmetric, normalized-ish dense adjacency
    weight = init_weight(k_w, F_IN, F_OUT)

    out = graph_convolution_k(x, adj, weight)
    jax.block_until_ready(out)
    assert out.shape == (N, K, F_OUT)
    assert jnp.allclose(out, reference(x, adj, weight), atol=1e-4, rtol=1e-4)

    # Config 2: larger N -> multiple row tiles (partial last tile) and
    # K*Fout = 96 -> lane-padded to 128 then sliced.
    N2, K2, F2_IN, F2_OUT = 320, 3, 16, 32
    k_x2, k_adj2, k_w2 = jax.random.split(jax.random.PRNGKey(1), 3)
    x2 = jax.random.normal(k_x2, (N2, K2, F2_IN), dtype=jnp.float32)
    a2 = jax.random.uniform(k_adj2, (N2, N2), dtype=jnp.float32)
    adj2 = (a2 + a2.T) * 0.5 / N2
    weight2 = init_weight(k_w2, F2_IN, F2_OUT)

    out2 = graph_convolution_k(x2, adj2, weight2)
    jax.block_until_ready(out2)
    assert out2.shape == (N2, K2, F2_OUT)
    assert jnp.allclose(out2, reference(x2, adj2, weight2), atol=1e-4, rtol=1e-4)

    print("KERNEL_OK")
</pallas_src>

<mosaic_0001>
module attributes {stable_mosaic.version = 11 : i64} {
  func.func @support_kernel(%arg0: i32, %arg1: memref<32x64xf32, #tpu.memory_space<vmem>>, %arg2: memref<64x128xf32, #tpu.memory_space<vmem>>, %arg3: memref<32x128xf32, #tpu.memory_space<vmem>>) attributes {dimension_semantics = [#tpu.dimension_semantics<parallel>], iteration_bounds = array<i64: 1>, scalar_prefetch = 0 : i64, scratch_operands = 0 : i64, tpu.core_type = #tpu.core_type<tc>, window_params = [{transform_indices = @transform_0, window_bounds = array<i64: 32, 64>}, {pipeline_mode = #tpu.pipeline_mode<synchronous>, transform_indices = @transform_1, window_bounds = array<i64: 64, 128>}, {transform_indices = @transform_2, window_bounds = array<i64: 32, 128>}]} {
    %c0 = arith.constant 0 : index
    %c0_0 = arith.constant 0 : index
    %0 = vector.load %arg1[%c0, %c0_0] : memref<32x64xf32, #tpu.memory_space<vmem>>, vector<32x64xf32>
    %c0_1 = arith.constant 0 : index
    %c0_2 = arith.constant 0 : index
    %1 = vector.load %arg2[%c0_1, %c0_2] : memref<64x128xf32, #tpu.memory_space<vmem>>, vector<64x128xf32>
    %cst = arith.constant dense<0.000000e+00> : vector<32x128xf32>
    %2 = tpu.matmul %0, %1, %cst {dimension_numbers = #tpu.dot_dimension_numbers<[1], [0], [0], [1], [0, 0, 1, 1], [], []>} : vector<32x64xf32>, vector<64x128xf32>, vector<32x128xf32> -> vector<32x128xf32>
    %c0_3 = arith.constant 0 : index
    %c0_4 = arith.constant 0 : index
    %3 = vector.load %arg3[%c0_3, %c0_4] : memref<32x128xf32, #tpu.memory_space<vmem>>, vector<32x128xf32>
    tpu.vector_store %arg3[%c0_3, %c0_4], %2 {strides = array<i32>} : memref<32x128xf32, #tpu.memory_space<vmem>>, vector<32x128xf32>,
    return
  }
  func.func @transform_0(%arg0: i32) -> (i32, i32) {
    %c0_i32 = arith.constant 0 : i32
    %c0_i32_0 = arith.constant 0 : i32
    return %arg0, %c0_i32 : i32, i32
  }
  func.func @transform_1(%arg0: i32) -> (i32, i32) {
    %c0_i32 = arith.constant 0 : i32
    %c0_i32_0 = arith.constant 0 : i32
    %c0_i32_1 = arith.constant 0 : i32
    return %c0_i32, %c0_i32_0 : i32, i32
  }
  func.func @transform_2(%arg0: i32) -> (i32, i32) {
    %c0_i32 = arith.constant 0 : i32
    %c0_i32_0 = arith.constant 0 : i32
    return %arg0, %c0_i32 : i32, i32
  }
}

</mosaic_0001>

<llo_original>
// kernel: tpu_custom_call.1
$region0: #{tpu_custom_call.1}
  #allocation0 [shape = 'u32[]', space=smem, size = 0x4, offset = 0x4, fixed_abs, tag = 'smem constant byte address 0x4 - core index']
  #allocation1 [shape = 'u32[144,128]{1,0:T(1,128)}', space=vmem, size = 0x12000, scoped, tag = 'internal scratch']
  %s0 = inlined_call_operand.hbm [shape: f32[32,64], index: 0, kind: input, shape index: {}]
  %s1 = inlined_call_operand.hbm [shape: f32[64,128], index: 1, kind: input, shape index: {}]
  %s2 = inlined_call_operand.hbm [shape: f32[32,128], index: 2, kind: output, shape index: {}]
  %s3 = sld [smem:[#allocation0]]
  $region26: #{tpu_custom_call.1} parent=0
    _
  %s5 = ssub.s32 1, %s3
  %s6 = scalar_select 0, %s5, %s3
  $region1: #{tpu_custom_call.1} parent=0
    #allocation2 [shape = 'u8[16384]{0}', space=vmem, size = 0x4000, scoped, tag = 'input window, operand 0, single buffered']
    #allocation3 [shape = 's32[1]{0}', space=sflag, size = 0x4, scoped, tag = 'scoped memory for tpu_custom_call.1']
    #allocation4 [shape = 's32[1]{0}', space=sflag, size = 0x4, scoped, tag = 'scoped memory for tpu_custom_call.1']
    #allocation5 [shape = 'u8[32768]{0}', space=vmem, size = 0x8000, scoped, tag = 'input window, operand 1, single buffered']
    #allocation6 [shape = 's32[1]{0}', space=sflag, size = 0x4, scoped, tag = 'scoped memory for tpu_custom_call.1']
    #allocation7 [shape = 'u8[16384]{0}', space=vmem, size = 0x4000, scoped, tag = 'output window, operand 0, single buffered']
    %7 = vsyncpa [#allocation3], 0
    %8 = vsyncpa [#allocation6], 0
    %9 = vsyncpa [#allocation4], 0
    // Predicated region
    $region2: #{tpu_custom_call.1} parent=1 // pred_check
      _
    $region3: #{tpu_custom_call.1} parent=1 // pred_check_branch
      %11 = sbr.rel (0) target = $region5
    $region4: #{tpu_custom_call.1} parent=1 // pred_region
      %s13 = ssub.s32 512, 512
      %14 = vsyncadd [#allocation3], %s13
      %s15 = sshll.u32 [#allocation2], 4
      %s16 = int_to_ptr.vmem [resolvable:$true] %s15
      %21 = dma.hbm_to_vmem [thread:$0]  %s0, 512, %s16, [#allocation3], 128, 128, 8
    $region5: #{tpu_custom_call.1} parent=1 // pred_fallthru
      _
    // Predicated region
    $region6: #{tpu_custom_call.1} parent=1 // pred_check
      _
    $region7: #{tpu_custom_call.1} parent=1 // pred_check_branch
      %23 = sbr.rel (0) target = $region9
    $region8: #{tpu_custom_call.1} parent=1 // pred_region
      %s25 = ssub.s32 1024, 1024
      %26 = vsyncadd [#allocation6], %s25
      %s27 = sshll.u32 [#allocation5], 4
      %s28 = int_to_ptr.vmem [resolvable:$true] %s27
      %33 = dma.hbm_to_vmem [thread:$0]  %s1, 1024, %s28, [#allocation6], 128, 128, 8
    $region9: #{tpu_custom_call.1} parent=1 // pred_fallthru
      _
    // Predicated region
    $region10: #{tpu_custom_call.1} parent=1 // pred_check
      _
    $region11: #{tpu_custom_call.1} parent=1 // pred_check_branch
      %35 = sbr.rel (0) target = $region13
    $region12: #{tpu_custom_call.1} parent=1 // pred_region
      %36 = dma.done [#allocation3], 512
    $region13: #{tpu_custom_call.1} parent=1 // pred_fallthru
      _
    // Predicated region
    $region14: #{tpu_custom_call.1} parent=1 // pred_check
      _
    $region15: #{tpu_custom_call.1} parent=1 // pred_check_branch
      %38 = sbr.rel (0) target = $region17
    $region16: #{tpu_custom_call.1} parent=1 // pred_region
      %39 = dma.done [#allocation6], 1024
    $region17: #{tpu_custom_call.1} parent=1 // pred_fallthru
      _
    %v40 = vld [vmem:[#allocation2] sm:$0xff]
    %v41 = vld [vmem:[#allocation2 + $0x8] sm:$0xff]
    %v42 = vld [vmem:[#allocation2 + $0x10] sm:$0xff]
    %v43 = vld [vmem:[#allocation2 + $0x18] sm:$0xff]
    %v44 = vld [vmem:[#allocation5] sm:$0xff]
    %v45 = vld [vmem:[#allocation5 + $0x8] sm:$0xff]
    %v46 = vld [vmem:[#allocation5 + $0x10] sm:$0xff]
    %v47 = vld [vmem:[#allocation5 + $0x18] sm:$0xff]
    %v48 = vld [vmem:[#allocation5 + $0x20] sm:$0xff]
    %v49 = vld [vmem:[#allocation5 + $0x28] sm:$0xff]
    %v50 = vld [vmem:[#allocation5 + $0x30] sm:$0xff]
    %v51 = vld [vmem:[#allocation5 + $0x38] sm:$0xff]
    %vm52 = vcmask 523264
    %v54 = vsel %vm52, %v40, 0
    %v57 = vsel %vm52, %v41, 0
    %v60 = vsel %vm52, %v42, 0
    %v63 = vsel %vm52, %v43, 0
    %65 = vmatprep.subr.mxu0 0.0
    %66 = vmatpush1.msra.mxu0 %v44
    %67 = vmatprep.subr.mxu0 0.0
    %68 = vmatpush1.msra.mxu0 %v45
    %69 = vmatprep.subr.mxu0 0.0
    %70 = vmatpush1.msra.mxu0 %v46
    %71 = vmatprep.subr.mxu0 0.0
    %72 = vmatpush1.msra.mxu0 %v47
    %73 = vmatprep.subr.mxu0 0.0
    %74 = vmatpush1.msra.mxu0 %v48
    %75 = vmatprep.subr.mxu0 0.0
    %76 = vmatpush1.msra.mxu0 %v49
    %77 = vmatprep.subr.mxu0 0.0
    %78 = vmatpush1.msra.mxu0 %v50
    %79 = vmatprep.subr.mxu0 0.0
    %80 = vmatpush1.msra.mxu0 %v51
    %81 = vmatprep.subr.mxu0 0.0
    %82 = vmatpush1.msra.mxu0 0.0
    %83 = vmatprep.subr.mxu0 0.0
    %84 = vmatpush1.msra.mxu0 0.0
    %85 = vmatprep.subr.mxu0 0.0
    %86 = vmatpush1.msra.mxu0 0.0
    %87 = vmatprep.subr.mxu0 0.0
    %88 = vmatpush1.msra.mxu0 0.0
    %89 = vmatprep.subr.mxu0 0.0
    %90 = vmatpush1.msra.mxu0 0.0
    %91 = vmatprep.subr.mxu0 0.0
    %92 = vmatpush1.msra.mxu0 0.0
    %93 = vmatprep.subr.mxu0 0.0
    %94 = vmatpush1.msra.mxu0 0.0
    %95 = vmatprep.subr.mxu0 0.0
    %96 = vmatpush1.msra.mxu0 0.0
    %97 = vmatprep.subr.mxu0 0.0
    %98 = vmatpush1.msra.mxu0 0.0
    %99 = vmatprep.subr.mxu0 0.0
    %100 = vmatpush1.msra.mxu0 0.0
    %101 = vmatprep.subr.mxu0 0.0
    %102 = vmatpush1.msra.mxu0 0.0
    %103 = vmatprep.subr.mxu0 0.0
    %104 = vmatpush1.msra.mxu0 0.0
    %105 = vmatprep.subr.mxu0 0.0
    %106 = vmatpush1.msra.mxu0 0.0
    %107 = vmatprep.subr.mxu0 0.0
    %108 = vmatpush1.msra.mxu0 0.0
    %109 = vmatprep.subr.mxu0 0.0
    %110 = vmatpush1.msra.mxu0 0.0
    %111 = vmatprep.subr.mxu0 0.0
    %112 = vmatpush1.msra.mxu0 0.0
    %113 = vmatprep.subr.mxu0 0.0
    %114 = vmatpush1.msra.mxu0 0.0
    %115 = vmatprep.subr.mxu0 0.0
    %116 = vmatpush1.msra.mxu0 0.0
    %117 = vmatprep.subr.mxu0 0.0
    %118 = vmatpush1.msra.mxu0 0.0
    %119 = vmatprep.subr.mxu0 0.0
    %120 = vmatpush1.msra.mxu0 0.0
    %121 = vmatprep.subr.mxu0 0.0
    %122 = vmatpush1.msra.mxu0 0.0
    %123 = vmatprep.subr.mxu0 0.0
    %124 = vmatpush1.msra.mxu0 0.0
    %125 = vmatprep.subr.mxu0 0.0
    %126 = vmatpush1.msra.mxu0 0.0
    %127 = vmatprep.subr.mxu0 0.0
    %128 = vmatpush1.msra.mxu0 0.0
    %129 = vmatprep.mubr.f32.mxu0 0.0
    %130 = vmatmul.mubr.f32.gmra.mrb[0].mxu0 %v54
    %v131 = vpop.f32.mrb[0].mxu0
    %v132 = vadd.f32 0.0, %v131
    %v133 = vpop.f32.mrb[0].mxu0
    %134 = vmatprep.mubr.f32.mxu0 0.0
    %135 = vmatmul.mubr.f32.gmra.mrb[0].mxu0 %v57
    %v136 = vpop.f32.mrb[0].mxu0
    %v137 = vadd.f32 0.0, %v136
    %v138 = vpop.f32.mrb[0].mxu0
    %139 = vmatprep.mubr.f32.mxu0 0.0
    %140 = vmatmul.mubr.f32.gmra.mrb[0].mxu0 %v60
    %v141 = vpop.f32.mrb[0].mxu0
    %v142 = vadd.f32 0.0, %v141
    %v143 = vpop.f32.mrb[0].mxu0
    %144 = vmatprep.mubr.f32.mxu0 0.0
    %145 = vmatmul.mubr.f32.gmra.mrb[0].mxu0 %v63
    %v146 = vpop.f32.mrb[0].mxu0
    %v147 = vadd.f32 0.0, %v146
    %v148 = vpop.f32.mrb[0].mxu0
    %149 = vdwg.mxu0
    %150 = vst [vmem:[#allocation7] sm:$0xff] %v132
    %151 = vst [vmem:[#allocation7 + $0x8] sm:$0xff] %v137
    %152 = vst [vmem:[#allocation7 + $0x10] sm:$0xff] %v142
    %153 = vst [vmem:[#allocation7 + $0x18] sm:$0xff] %v147
    // Predicated region
    $region18: #{tpu_custom_call.1} parent=1 // pred_check
      _
    $region19: #{tpu_custom_call.1} parent=1 // pred_check_branch
      %155 = sbr.rel (0) target = $region21
    $region20: #{tpu_custom_call.1} parent=1 // pred_region
      %s157 = ssub.s32 512, 512
      %158 = vsyncadd [#allocation4], %s157
      %s159 = sshll.u32 [#allocation7], 4
      %s160 = int_to_ptr.vmem [resolvable:$true] %s159
      %165 = dma.vmem_to_hbm [thread:$0]  %s160, 512, %s2, [#allocation4], 128, 128, 8
    $region21: #{tpu_custom_call.1} parent=1 // pred_fallthru
      _
    // Predicated region
    $region22: #{tpu_custom_call.1} parent=1 // pred_check
      _
    $region23: #{tpu_custom_call.1} parent=1 // pred_check_branch
      %167 = sbr.rel (0) target = $region25
    $region24: #{tpu_custom_call.1} parent=1 // pred_region
      %168 = dma.done [#allocation4], 512
    $region25: #{tpu_custom_call.1} parent=1 // pred_fallthru
      _
    %169 = vsyncpa [#allocation3], 1
    %170 = vsyncpa [#allocation6], 1
    %171 = vsyncpa [#allocation4], 1

</llo_original>
